<compile_context>
chip_gen: v6e
topology: v6e:2x2x1
jax: 0.10.0
libtpu: 0.0.40
codegen_flags: <defaults>
</compile_context>

<pallas_src>
import functools

import jax
import jax.numpy as jnp
from jax import lax
from jax.experimental import pallas as pl
from jax.experimental.pallas import tpu as pltpu


def dwsep_kernel(x_ref, p_ref, o_ref, *, H, W, B, Cin, Cout,
                 OFF_W, OFF_BIAS, OFF_WD):
    # x_ref : (B*Cin,  H*W)   input, NCHW with (B, Cin) collapsed on sublanes
    # p_ref : (NROW,   128)   packed params:
    #           [:B*Cout, OFF_W:OFF_W+B*Cin]  block-diag 1x1 weight (BN folded)
    #           [:B*Cout, OFF_BIAS]           fused BN bias
    #           [:B*Cin,  OFF_WD:OFF_WD+9]    depthwise taps (tap = kh*3+kw)
    # o_ref : (B*Cout, H*W)
    HW = H * W
    BC = B * Cin
    BCO = B * Cout

    x = x_ref[...]                                            # (BC, HW) f32

    # Boundary masks over the flattened spatial axis (built once, reused).
    col = lax.broadcasted_iota(jnp.int32, (BC, HW), 1)
    wpos = col % W
    not_top = col >= W                      # kills h == 0 after the +W roll
    not_bot = col < (HW - W)                # kills h == H-1 after the -W roll
    not_left = wpos > 0                     # kills w == 0 for the kw=0 group
    not_right = wpos < (W - 1)              # kills w == W-1 for the kw=2 group

    # h-shifted copies (XLU lane rotations; wrapped rows zeroed once).
    x_up = jnp.where(not_top, pltpu.roll(x, W, axis=1), 0.0)       # x[h-1, w]
    x_dn = jnp.where(not_bot, pltpu.roll(x, HW - W, axis=1), 0.0)  # x[h+1, w]

    # Per-row (batch*channel) depthwise tap weights, lane-broadcast per tap.
    wd_all = p_ref[0:BC, OFF_WD:OFF_WD + 9]                   # (BC, 9)

    def tapw(t):
        return wd_all[:, t:t + 1]                             # (BC, 1)

    # Accumulate the three kw tap-groups, then shift + mask ONCE per group.
    s_l = x_up * tapw(0) + x * tapw(3) + x_dn * tapw(6)       # kw = 0 taps
    s_m = x_up * tapw(1) + x * tapw(4) + x_dn * tapw(7)       # kw = 1 taps
    s_r = x_up * tapw(2) + x * tapw(5) + x_dn * tapw(8)       # kw = 2 taps

    dw = (s_m
          + jnp.where(not_left, pltpu.roll(s_l, 1, axis=1), 0.0)
          + jnp.where(not_right, pltpu.roll(s_r, HW - 1, axis=1), 0.0))

    # Pointwise 1x1 conv (+ folded BN scale) for the WHOLE batch as one MXU
    # matmul with the block-diagonal weight; epilogue is +bias and ReLU.
    w_blk = p_ref[0:BCO, OFF_W:OFF_W + BC]                    # (B*Cout, B*Cin)
    bias = p_ref[0:BCO, OFF_BIAS:OFF_BIAS + 1]                # (B*Cout, 1)
    acc = jnp.dot(w_blk, dw, preferred_element_type=jnp.float32)   # (BCO, HW)
    o_ref[...] = jnp.maximum(acc + bias, 0.0).astype(o_ref.dtype)


@functools.partial(jax.jit, static_argnames=("eps",))
def depthwise_separable_conv_forward(x, wd, wp, gamma, beta, run_mean, run_var,
                                     eps=1e-5):
    """x: (B, Cin, H, W) NCHW; wd: (Cin, 1, 3, 3); wp: (Cout, Cin, 1, 1).
    Returns (B, Cout, H, W) NCHW, matching the PyTorch module (eval-mode BN)."""
    B, Cin, H, W = x.shape
    Cout = wp.shape[0]
    HW = H * W
    BC = B * Cin
    BCO = B * Cout
    NROW = ((max(BCO, BC) + 7) // 8) * 8

    # Packed-parameter column layout (all within one 128-lane slab).
    OFF_W = 0
    OFF_BIAS = BC
    OFF_WD = BC + 1
    assert OFF_WD + 9 <= 128, "param slab layout overflow"

    # Free reshape of contiguous NCHW -> (B*Cin, H*W); no transposes anywhere.
    x_flat = x.reshape(BC, HW).astype(jnp.float32)

    # Fold eval-mode BN scale into the pointwise weight.
    inv_std = 1.0 / jnp.sqrt(run_var + eps)
    scale = gamma * inv_std                                            # (Cout,)
    wp_s = wp[:, :, 0, 0].astype(jnp.float32) * scale[:, None]         # (Cout, Cin)
    bias_vec = (beta - run_mean * scale).astype(jnp.float32)           # (Cout,)

    # Block-diagonal pointwise weight -> one MXU matmul covers the whole batch.
    w_blk = jnp.kron(jnp.eye(B, dtype=jnp.float32), wp_s)              # (BCO, BC)
    bias_blk = jnp.tile(bias_vec, B)                                   # (BCO,)
    wd_rows = jnp.tile(wd[:, 0].reshape(Cin, 9).astype(jnp.float32), (B, 1))

    # Single lane-dense packed parameter slab (one DMA instead of three).
    params = jnp.zeros((NROW, 128), jnp.float32)
    params = params.at[:BCO, OFF_W:OFF_W + BC].set(w_blk)
    params = params.at[:BCO, OFF_BIAS].set(bias_blk)
    params = params.at[:BC, OFF_WD:OFF_WD + 9].set(wd_rows)

    kernel = functools.partial(dwsep_kernel, H=H, W=W, B=B, Cin=Cin, Cout=Cout,
                               OFF_W=OFF_W, OFF_BIAS=OFF_BIAS, OFF_WD=OFF_WD)

    out_flat = pl.pallas_call(
        kernel,
        out_shape=jax.ShapeDtypeStruct((BCO, HW), jnp.float32),
        grid_spec=pltpu.PrefetchScalarGridSpec(
            num_scalar_prefetch=0,
            grid=(1,),
            in_specs=[
                pl.BlockSpec((BC, HW), lambda i: (0, 0)),
                pl.BlockSpec((NROW, 128), lambda i: (0, 0)),
            ],
            out_specs=pl.BlockSpec((BCO, HW), lambda i: (0, 0)),
        ),
        compiler_params=pltpu.CompilerParams(
            dimension_semantics=("arbitrary",)),
    )(x_flat, params)

    # TODO(synk): for production BEV sizes (H,W ~ 180-256, C ~ 128+) add an
    # H-tile grid axis (1-row halo) marked "parallel" so v7x's two TensorCores
    # are both used, size the tile for v7x's 64 MiB VMEM (set vmem_limit_bytes),
    # and feed bf16 operands to the MXU on v6e/v7x. At 2x4x16x16 the op is
    # launch-bound and a single invocation is fastest.

    return out_flat.reshape(B, Cout, H, W)


def reference_forward(x, wd, wp, gamma, beta, run_mean, run_var, eps=1e-5):
    """Plain-JAX reference of the PyTorch module (eval-mode BN), NCHW."""
    y = lax.conv_general_dilated(
        x, wd, window_strides=(1, 1), padding=((1, 1), (1, 1)),
        dimension_numbers=("NCHW", "OIHW", "NCHW"),
        feature_group_count=x.shape[1])
    y = lax.conv_general_dilated(
        y, wp, window_strides=(1, 1), padding=((0, 0), (0, 0)),
        dimension_numbers=("NCHW", "OIHW", "NCHW"))
    inv_std = 1.0 / jnp.sqrt(run_var + eps)
    scale = (gamma * inv_std)[None, :, None, None]
    bias = (beta - run_mean * gamma * inv_std)[None, :, None, None]
    return jnp.maximum(y * scale + bias, 0.0)


if __name__ == "__main__":
    # Small shapes consistent with the module: batch=2, in_channels=4,
    # spatial 16x16, out_channels=8.
    B, Cin, H, W = 2, 4, 16, 16
    Cout = 8

    key = jax.random.PRNGKey(0)
    k1, k2, k3, k4, k5, k6, k7 = jax.random.split(key, 7)

    x = jax.random.normal(k1, (B, Cin, H, W), jnp.float32)
    wd = jax.random.normal(k2, (Cin, 1, 3, 3), jnp.float32) * 0.3     # depthwise
    wp = jax.random.normal(k3, (Cout, Cin, 1, 1), jnp.float32) * 0.3  # pointwise
    gamma = 1.0 + 0.1 * jax.random.normal(k4, (Cout,), jnp.float32)
    beta = 0.1 * jax.random.normal(k5, (Cout,), jnp.float32)
    run_mean = 0.1 * jax.random.normal(k6, (Cout,), jnp.float32)
    run_var = jnp.abs(jax.random.normal(k7, (Cout,), jnp.float32)) + 0.5

    out = depthwise_separable_conv_forward(x, wd, wp, gamma, beta,
                                           run_mean, run_var)
    out = jax.block_until_ready(out)

    ref = reference_forward(x, wd, wp, gamma, beta, run_mean, run_var)
    assert out.shape == (B, Cout, H, W)
    assert jnp.allclose(out, ref, atol=1e-4, rtol=1e-4), "mismatch vs reference"
    print("KERNEL_OK")
</pallas_src>

<mosaic_0001>
module attributes {stable_mosaic.version = 11 : i64} {
  func.func @dwsep_kernel(%arg0: i32, %arg1: memref<8x256xf32, #tpu.memory_space<vmem>>, %arg2: memref<16x128xf32, #tpu.memory_space<vmem>>, %arg3: memref<16x256xf32, #tpu.memory_space<vmem>>) attributes {dimension_semantics = [#tpu.dimension_semantics<arbitrary>], iteration_bounds = array<i64: 1>, scalar_prefetch = 0 : i64, scratch_operands = 0 : i64, tpu.core_type = #tpu.core_type<tc>, window_params = [{pipeline_mode = #tpu.pipeline_mode<synchronous>, transform_indices = @transform_0, window_bounds = array<i64: 8, 256>}, {pipeline_mode = #tpu.pipeline_mode<synchronous>, transform_indices = @transform_1, window_bounds = array<i64: 16, 128>}, {pipeline_mode = #tpu.pipeline_mode<synchronous>, transform_indices = @transform_2, window_bounds = array<i64: 16, 256>}]} {
    %c0 = arith.constant 0 : index
    %c0_0 = arith.constant 0 : index
    %0 = vector.load %arg1[%c0, %c0_0] : memref<8x256xf32, #tpu.memory_space<vmem>>, vector<8x256xf32>
    %1 = tpu.iota {dimensions = array<i32: 1>} : vector<8x256xi32>
    %c16_i32 = arith.constant 16 : i32
    %c0_i32 = arith.constant 0 : i32
    %2 = arith.cmpi eq, %c16_i32, %c0_i32 : i32
    %c1_i32 = arith.constant 1 : i32
    %3 = arith.select %2, %c1_i32, %c16_i32 : i32
    %4 = vector.broadcast %3 : i32 to vector<8x256xi32>
    %5 = arith.remsi %1, %4 : vector<8x256xi32>
    %c0_i32_1 = arith.constant 0 : i32
    %6 = vector.broadcast %c0_i32_1 : i32 to vector<8x256xi32>
    %7 = arith.cmpi ne, %5, %6 : vector<8x256xi32>
    %c0_i32_2 = arith.constant 0 : i32
    %8 = vector.broadcast %c0_i32_2 : i32 to vector<8x256xi32>
    %9 = arith.cmpi slt, %5, %8 : vector<8x256xi32>
    %c0_i32_3 = arith.constant 0 : i32
    %10 = arith.cmpi slt, %3, %c0_i32_3 : i32
    %11 = vector.broadcast %10 : i1 to vector<8x256xi1>
    %12 = vector.broadcast %11 : vector<8x256xi1> to vector<8x256xi1>
    %13 = arith.xori %9, %12 : vector<8x256xi1>
    %14 = arith.andi %13, %7 : vector<8x256xi1>
    %15 = vector.broadcast %3 : i32 to vector<8x256xi32>
    %16 = arith.addi %5, %15 : vector<8x256xi32>
    %17 = arith.select %14, %16, %5 : vector<8x256xi1>, vector<8x256xi32>
    %c16_i32_4 = arith.constant 16 : i32
    %18 = vector.broadcast %c16_i32_4 : i32 to vector<8x256xi32>
    %19 = arith.cmpi sge, %1, %18 : vector<8x256xi32>
    %c240_i32 = arith.constant 240 : i32
    %20 = vector.broadcast %c240_i32 : i32 to vector<8x256xi32>
    %21 = arith.cmpi slt, %1, %20 : vector<8x256xi32>
    %c0_i32_5 = arith.constant 0 : i32
    %22 = vector.broadcast %c0_i32_5 : i32 to vector<8x256xi32>
    %23 = arith.cmpi sgt, %17, %22 : vector<8x256xi32>
    %c15_i32 = arith.constant 15 : i32
    %24 = vector.broadcast %c15_i32 : i32 to vector<8x256xi32>
    %25 = arith.cmpi slt, %17, %24 : vector<8x256xi32>
    %c16_i32_6 = arith.constant 16 : i32
    %26 = tpu.dynamic_rotate %0 by %c16_i32_6 dim 1 : vector<8x256xf32>, i32 -> vector<8x256xf32>
    %cst = arith.constant 0.000000e+00 : f32
    %27 = vector.broadcast %cst : f32 to vector<8x256xf32>
    %28 = arith.select %19, %26, %27 : vector<8x256xi1>, vector<8x256xf32>
    %c240_i32_7 = arith.constant 240 : i32
    %29 = tpu.dynamic_rotate %0 by %c240_i32_7 dim 1 : vector<8x256xf32>, i32 -> vector<8x256xf32>
    %cst_8 = arith.constant 0.000000e+00 : f32
    %30 = vector.broadcast %cst_8 : f32 to vector<8x256xf32>
    %31 = arith.select %21, %29, %30 : vector<8x256xi1>, vector<8x256xf32>
    %c0_9 = arith.constant 0 : index
    %c9 = arith.constant 9 : index
    %32 = vector.load %arg2[%c0_9, %c9] : memref<16x128xf32, #tpu.memory_space<vmem>>, vector<8x9xf32>
    %33 = vector.extract_strided_slice %32 {offsets = [0, 0], sizes = [8, 1], strides = [1, 1]} : vector<8x9xf32> to vector<8x1xf32>
    %34 = vector.broadcast %33 : vector<8x1xf32> to vector<8x256xf32>
    %35 = arith.mulf %28, %34 : vector<8x256xf32>
    %36 = vector.extract_strided_slice %32 {offsets = [0, 3], sizes = [8, 1], strides = [1, 1]} : vector<8x9xf32> to vector<8x1xf32>
    %37 = vector.broadcast %36 : vector<8x1xf32> to vector<8x256xf32>
    %38 = arith.mulf %0, %37 : vector<8x256xf32>
    %39 = arith.addf %35, %38 : vector<8x256xf32>
    %40 = vector.extract_strided_slice %32 {offsets = [0, 6], sizes = [8, 1], strides = [1, 1]} : vector<8x9xf32> to vector<8x1xf32>
    %41 = vector.broadcast %40 : vector<8x1xf32> to vector<8x256xf32>
    %42 = arith.mulf %31, %41 : vector<8x256xf32>
    %43 = arith.addf %39, %42 : vector<8x256xf32>
    %44 = vector.extract_strided_slice %32 {offsets = [0, 1], sizes = [8, 1], strides = [1, 1]} : vector<8x9xf32> to vector<8x1xf32>
    %45 = vector.broadcast %44 : vector<8x1xf32> to vector<8x256xf32>
    %46 = arith.mulf %28, %45 : vector<8x256xf32>
    %47 = vector.extract_strided_slice %32 {offsets = [0, 4], sizes = [8, 1], strides = [1, 1]} : vector<8x9xf32> to vector<8x1xf32>
    %48 = vector.broadcast %47 : vector<8x1xf32> to vector<8x256xf32>
    %49 = arith.mulf %0, %48 : vector<8x256xf32>
    %50 = arith.addf %46, %49 : vector<8x256xf32>
    %51 = vector.extract_strided_slice %32 {offsets = [0, 7], sizes = [8, 1], strides = [1, 1]} : vector<8x9xf32> to vector<8x1xf32>
    %52 = vector.broadcast %51 : vector<8x1xf32> to vector<8x256xf32>
    %53 = arith.mulf %31, %52 : vector<8x256xf32>
    %54 = arith.addf %50, %53 : vector<8x256xf32>
    %55 = vector.extract_strided_slice %32 {offsets = [0, 2], sizes = [8, 1], strides = [1, 1]} : vector<8x9xf32> to vector<8x1xf32>
    %56 = vector.broadcast %55 : vector<8x1xf32> to vector<8x256xf32>
    %57 = arith.mulf %28, %56 : vector<8x256xf32>
    %58 = vector.extract_strided_slice %32 {offsets = [0, 5], sizes = [8, 1], strides = [1, 1]} : vector<8x9xf32> to vector<8x1xf32>
    %59 = vector.broadcast %58 : vector<8x1xf32> to vector<8x256xf32>
    %60 = arith.mulf %0, %59 : vector<8x256xf32>
    %61 = arith.addf %57, %60 : vector<8x256xf32>
    %62 = vector.extract_strided_slice %32 {offsets = [0, 8], sizes = [8, 1], strides = [1, 1]} : vector<8x9xf32> to vector<8x1xf32>
    %63 = vector.broadcast %62 : vector<8x1xf32> to vector<8x256xf32>
    %64 = arith.mulf %31, %63 : vector<8x256xf32>
    %65 = arith.addf %61, %64 : vector<8x256xf32>
    %c1_i32_10 = arith.constant 1 : i32
    %66 = tpu.dynamic_rotate %43 by %c1_i32_10 dim 1 : vector<8x256xf32>, i32 -> vector<8x256xf32>
    %cst_11 = arith.constant 0.000000e+00 : f32
    %67 = vector.broadcast %cst_11 : f32 to vector<8x256xf32>
    %68 = arith.select %23, %66, %67 : vector<8x256xi1>, vector<8x256xf32>
    %69 = arith.addf %54, %68 : vector<8x256xf32>
    %c255_i32 = arith.constant 255 : i32
    %70 = tpu.dynamic_rotate %65 by %c255_i32 dim 1 : vector<8x256xf32>, i32 -> vector<8x256xf32>
    %cst_12 = arith.constant 0.000000e+00 : f32
    %71 = vector.broadcast %cst_12 : f32 to vector<8x256xf32>
    %72 = arith.select %25, %70, %71 : vector<8x256xi1>, vector<8x256xf32>
    %73 = arith.addf %69, %72 : vector<8x256xf32>
    %c0_13 = arith.constant 0 : index
    %c0_14 = arith.constant 0 : index
    %74 = vector.load %arg2[%c0_13, %c0_14] : memref<16x128xf32, #tpu.memory_space<vmem>>, vector<16x8xf32>
    %c0_15 = arith.constant 0 : index
    %c8 = arith.constant 8 : index
    %75 = vector.load %arg2[%c0_15, %c8] : memref<16x128xf32, #tpu.memory_space<vmem>>, vector<16x1xf32>
    %cst_16 = arith.constant dense<0.000000e+00> : vector<16x256xf32>
    %76 = tpu.matmul %74, %73, %cst_16 {dimension_numbers = #tpu.dot_dimension_numbers<[1], [0], [0], [1], [0, 0, 1, 1], [], []>} : vector<16x8xf32>, vector<8x256xf32>, vector<16x256xf32> -> vector<16x256xf32>
    %77 = vector.broadcast %75 : vector<16x1xf32> to vector<16x256xf32>
    %78 = arith.addf %76, %77 : vector<16x256xf32>
    %cst_17 = arith.constant 0.000000e+00 : f32
    %79 = vector.broadcast %cst_17 : f32 to vector<16x256xf32>
    %80 = arith.maximumf %78, %79 : vector<16x256xf32>
    %c0_18 = arith.constant 0 : index
    %c0_19 = arith.constant 0 : index
    %81 = vector.load %arg3[%c0_18, %c0_19] : memref<16x256xf32, #tpu.memory_space<vmem>>, vector<16x256xf32>
    tpu.vector_store %arg3[%c0_18, %c0_19], %80 {strides = array<i32>} : memref<16x256xf32, #tpu.memory_space<vmem>>, vector<16x256xf32>,
    return
  }
  func.func @transform_0(%arg0: i32) -> (i32, i32) {
    %c0_i32 = arith.constant 0 : i32
    %c0_i32_0 = arith.constant 0 : i32
    %c0_i32_1 = arith.constant 0 : i32
    return %c0_i32, %c0_i32_0 : i32, i32
  }
  func.func @transform_1(%arg0: i32) -> (i32, i32) {
    %c0_i32 = arith.constant 0 : i32
    %c0_i32_0 = arith.constant 0 : i32
    %c0_i32_1 = arith.constant 0 : i32
    return %c0_i32, %c0_i32_0 : i32, i32
  }
  func.func @transform_2(%arg0: i32) -> (i32, i32) {
    %c0_i32 = arith.constant 0 : i32
    %c0_i32_0 = arith.constant 0 : i32
    %c0_i32_1 = arith.constant 0 : i32
    return %c0_i32, %c0_i32_0 : i32, i32
  }
}

</mosaic_0001>

<llo_original>
// kernel: depthwise_separable_conv_forward.1
$region0: #{depthwise_separable_conv_forward.1}
  #allocation0 [shape = 'u32[]', space=smem, size = 0x4, offset = 0x4, fixed_abs, tag = 'smem constant byte address 0x4 - core index']
  #allocation1 [shape = 'u32[144,128]{1,0:T(1,128)}', space=vmem, size = 0x12000, scoped, tag = 'internal scratch']
  %s0 = inlined_call_operand.vmem [shape: f32[8,256], index: 0, kind: input, shape index: {}]
  %s1 = inlined_call_operand.vmem [shape: f32[16,128], index: 1, kind: input, shape index: {}]
  %s2 = inlined_call_operand.vmem [shape: f32[16,256], index: 2, kind: output, shape index: {}]
  %s3 = sld [smem:[#allocation0]]
  $region18: #{depthwise_separable_conv_forward.1} parent=0
    _
  %s5 = ssub.s32 1, %s3
  %s6 = scalar_select 0, %s5, %s3
  // Predicated region
  $region2: #{depthwise_separable_conv_forward.1} parent=0 // pred_check
    _
  $region3: #{depthwise_separable_conv_forward.1} parent=0 // pred_check_branch
    %8 = sbr.rel (0) target = $region5
  $region4: #{depthwise_separable_conv_forward.1} parent=0 // pred_region
    _
  $region5: #{depthwise_separable_conv_forward.1} parent=0 // pred_fallthru
    _
  // Predicated region
  $region6: #{depthwise_separable_conv_forward.1} parent=0 // pred_check
    _
  $region7: #{depthwise_separable_conv_forward.1} parent=0 // pred_check_branch
    %10 = sbr.rel (0) target = $region9
  $region8: #{depthwise_separable_conv_forward.1} parent=0 // pred_region
    _
  $region9: #{depthwise_separable_conv_forward.1} parent=0 // pred_fallthru
    _
  %v11 = vld [vmem:[%s0] sm:$0xff]
  %v12 = vld [vmem:[%s0 + $0x8] sm:$0xff]
  %v13 = vlaneseq
  %v14 = vand.u32 %v13, 127
  %v15 = vadd.s32 %v14, 128
  %vm16 = vcmp.lt.s32.totalorder %v14, 0
  %v17 = vsub.s32 0, %v14
  %v18 = vsel %vm16, %v17, %v14
  %v19 = vshrl.u32 %v18, 4
  %v20 = vand.u32 %v18, 15
  %v21 = vsub.s32 0, %v20
  %v22 = vsel %vm16, %v21, %v20
  %vm23 = vcmp.lt.s32.totalorder %v15, 0
  %v24 = vsub.s32 0, %v15
  %v25 = vsel %vm23, %v24, %v15
  %v26 = vshrl.u32 %v25, 4
  %v27 = vand.u32 %v25, 15
  %v28 = vsub.s32 0, %v27
  %v29 = vsel %vm23, %v28, %v27
  %vm30 = vcmp.ne.s32.totalorder %v22, 0
  %vm31 = vcmp.ne.s32.totalorder %v29, 0
  %vm32 = vcmp.lt.s32.totalorder %v22, 0
  %vm33 = vcmp.lt.s32.totalorder %v29, 0
  %vm34 = vmand %vm32, %vm30
  %vm35 = vmand %vm33, %vm31
  %v36 = vadd.s32 %v22, 16
  %v37 = vadd.s32 %v29, 16
  %v38 = vsel %vm34, %v36, %v22
  %v39 = vsel %vm35, %v37, %v29
  %vm40 = vcmp.ge.s32.totalorder %v14, 16
  %vm41 = vcmp.ge.s32.totalorder %v15, 16
  %vm42 = vcmp.lt.s32.totalorder %v14, 240
  %vm43 = vcmp.lt.s32.totalorder %v15, 240
  %vm44 = vcmp.gt.s32.totalorder %v38, 0
  %vm45 = vcmp.gt.s32.totalorder %v39, 0
  %vm46 = vcmp.lt.s32.totalorder %v38, 15
  %vm47 = vcmp.lt.s32.totalorder %v39, 15
  %48 = vrot.lane.b32.xlu0 %v11, 16
  %v49 = vpop.permute.xlu0 %48
  %50 = vrot.lane.b32.xlu0 %v12, 16
  %v51 = vpop.permute.xlu0 %50
  %vm52 = vcmp.lt.s32.totalorder %v14, 16
  %v53 = vsel %vm52, %v49, %v51
  %v54 = vsel %vm52, %v51, %v49
  %v55 = vsel %vm40, %v54, 0.0
  %v56 = vsel %vm41, %v53, 0.0
  %57 = vrot.lane.b32.xlu0 %v11, 112
  %v58 = vpop.permute.xlu0 %57
  %59 = vrot.lane.b32.xlu0 %v12, 112
  %v60 = vpop.permute.xlu0 %59
  %vm61 = vcmp.lt.s32.totalorder %v14, 112
  %v62 = vsel %vm61, %v58, %v60
  %v63 = vsel %vm61, %v60, %v58
  %v64 = vsel %vm42, %v62, 0.0
  %v65 = vsel %vm43, %v63, 0.0
  %v66 = vld [vmem:[%s1] sm:$0xff]
  %68 = vset.pattern.permute.xlu0 9
  %69 = vperm.xlu0 %68, %v66
  %v70 = vpop.permute.xlu0 %69
  %v72 = vmul.f32 %v55, %v70
  %v73 = vmul.f32 %v56, %v70
  %74 = vset.pattern.permute.xlu0 12
  %75 = vperm.xlu0 %74, %v66
  %v76 = vpop.permute.xlu0 %75
  %v78 = vmul.f32 %v11, %v76
  %v79 = vmul.f32 %v12, %v76
  %v80 = vadd.f32 %v72, %v78
  %v81 = vadd.f32 %v73, %v79
  %82 = vset.pattern.permute.xlu0 15
  %83 = vperm.xlu0 %82, %v66
  %v84 = vpop.permute.xlu0 %83
  %v86 = vmul.f32 %v64, %v84
  %v87 = vmul.f32 %v65, %v84
  %v88 = vadd.f32 %v80, %v86
  %v89 = vadd.f32 %v81, %v87
  %90 = vset.pattern.permute.xlu0 10
  %91 = vperm.xlu0 %90, %v66
  %v92 = vpop.permute.xlu0 %91
  %v94 = vmul.f32 %v55, %v92
  %v95 = vmul.f32 %v56, %v92
  %96 = vset.pattern.permute.xlu0 13
  %97 = vperm.xlu0 %96, %v66
  %v98 = vpop.permute.xlu0 %97
  %v100 = vmul.f32 %v11, %v98
  %v101 = vmul.f32 %v12, %v98
  %v102 = vadd.f32 %v94, %v100
  %v103 = vadd.f32 %v95, %v101
  %104 = vset.pattern.permute.xlu0 16
  %105 = vperm.xlu0 %104, %v66
  %v106 = vpop.permute.xlu0 %105
  %v108 = vmul.f32 %v64, %v106
  %v109 = vmul.f32 %v65, %v106
  %v110 = vadd.f32 %v102, %v108
  %v111 = vadd.f32 %v103, %v109
  %112 = vset.pattern.permute.xlu0 11
  %113 = vperm.xlu0 %112, %v66
  %v114 = vpop.permute.xlu0 %113
  %v116 = vmul.f32 %v55, %v114
  %v117 = vmul.f32 %v56, %v114
  %118 = vset.pattern.permute.xlu0 14
  %119 = vperm.xlu0 %118, %v66
  %v120 = vpop.permute.xlu0 %119
  %v122 = vmul.f32 %v11, %v120
  %v123 = vmul.f32 %v12, %v120
  %v124 = vadd.f32 %v116, %v122
  %v125 = vadd.f32 %v117, %v123
  %126 = vset.pattern.permute.xlu0 17
  %127 = vperm.xlu0 %126, %v66
  %v128 = vpop.permute.xlu0 %127
  %v130 = vmul.f32 %v64, %v128
  %v131 = vmul.f32 %v65, %v128
  %v132 = vadd.f32 %v124, %v130
  %v133 = vadd.f32 %v125, %v131
  %134 = vrot.lane.b32.xlu0 %v88, 1
  %v135 = vpop.permute.xlu0 %134
  %136 = vrot.lane.b32.xlu0 %v89, 1
  %v137 = vpop.permute.xlu0 %136
  %vm138 = vcmp.lt.s32.totalorder %v14, 1
  %v139 = vsel %vm138, %v135, %v137
  %v140 = vsel %vm138, %v137, %v135
  %v141 = vsel %vm44, %v140, 0.0
  %v142 = vsel %vm45, %v139, 0.0
  %v143 = vadd.f32 %v110, %v141
  %v144 = vadd.f32 %v111, %v142
  %145 = vrot.lane.b32.xlu0 %v132, 127
  %v146 = vpop.permute.xlu0 %145
  %147 = vrot.lane.b32.xlu0 %v133, 127
  %v148 = vpop.permute.xlu0 %147
  %vm149 = vcmp.lt.s32.totalorder %v14, 127
  %v150 = vsel %vm149, %v146, %v148
  %v151 = vsel %vm149, %v148, %v146
  %v152 = vsel %vm46, %v150, 0.0
  %v153 = vsel %vm47, %v151, 0.0
  %v154 = vadd.f32 %v143, %v152
  %v155 = vadd.f32 %v144, %v153
  %v156 = vld [vmem:[%s1] sm:$0xff]
  %v157 = vld [vmem:[%s1 + $0x8] sm:$0xff]
  %159 = vset.pattern.permute.xlu0 8
  %160 = vperm.xlu0 %159, %v156
  %v161 = vpop.permute.xlu0 %160
  %164 = vset.pattern.permute.xlu0 8
  %165 = vperm.xlu0 %164, %v157
  %v166 = vpop.permute.xlu0 %165
  %vm168 = vcmask 64512
  %v169 = vsel %vm168, %v156, 0
  %v171 = vsel %vm168, %v157, 0
  %173 = vmatprep.subr.mxu0 0.0
  %174 = vmatpush1.msra.mxu0 0.0
  %175 = vmatprep.subr.mxu0 0.0
  %176 = vmatpush1.msra.mxu0 0.0
  %177 = vmatprep.subr.mxu0 0.0
  %178 = vmatpush1.msra.mxu0 0.0
  %179 = vmatprep.subr.mxu0 0.0
  %180 = vmatpush1.msra.mxu0 0.0
  %181 = vmatprep.subr.mxu0 0.0
  %182 = vmatpush1.msra.mxu0 0.0
  %183 = vmatprep.subr.mxu0 0.0
  %184 = vmatpush1.msra.mxu0 0.0
  %185 = vmatprep.subr.mxu0 0.0
  %186 = vmatpush1.msra.mxu0 0.0
  %187 = vmatprep.subr.mxu0 0.0
  %188 = vmatpush1.msra.mxu0 0.0
  %189 = vmatprep.subr.mxu0 0.0
  %190 = vmatpush1.msra.mxu0 0.0
  %191 = vmatprep.subr.mxu0 0.0
  %192 = vmatpush1.msra.mxu0 0.0
  %193 = vmatprep.subr.mxu0 0.0
  %194 = vmatpush1.msra.mxu0 0.0
  %195 = vmatprep.subr.mxu0 0.0
  %196 = vmatpush1.msra.mxu0 0.0
  %197 = vmatprep.subr.mxu0 0.0
  %198 = vmatpush1.msra.mxu0 0.0
  %199 = vmatprep.subr.mxu0 0.0
  %200 = vmatpush1.msra.mxu0 0.0
  %201 = vmatprep.subr.mxu0 0.0
  %202 = vmatpush1.msra.mxu0 0.0
  %203 = vmatprep.subr.mxu0 %v155
  %204 = vmatpush1.msra.mxu0 %v154
  %205 = vmatprep.subr.mxu0 0.0
  %206 = vmatpush2.msra.mxu0 0.0
  %207 = vmatprep.subr.mxu0 0.0
  %208 = vmatpush2.msra.mxu0 0.0
  %209 = vmatprep.subr.mxu0 0.0
  %210 = vmatpush2.msra.mxu0 0.0
  %211 = vmatprep.subr.mxu0 0.0
  %212 = vmatpush2.msra.mxu0 0.0
  %213 = vmatprep.subr.mxu0 0.0
  %214 = vmatpush2.msra.mxu0 0.0
  %215 = vmatprep.subr.mxu0 0.0
  %216 = vmatpush2.msra.mxu0 0.0
  %217 = vmatprep.subr.mxu0 0.0
  %218 = vmatpush2.msra.mxu0 0.0
  %219 = vmatprep.subr.mxu0 0.0
  %220 = vmatpush2.msra.mxu0 0.0
  %221 = vmatprep.subr.mxu0 0.0
  %222 = vmatpush2.msra.mxu0 0.0
  %223 = vmatprep.subr.mxu0 0.0
  %224 = vmatpush2.msra.mxu0 0.0
  %225 = vmatprep.subr.mxu0 0.0
  %226 = vmatpush2.msra.mxu0 0.0
  %227 = vmatprep.subr.mxu0 0.0
  %228 = vmatpush2.msra.mxu0 0.0
  %229 = vmatprep.subr.mxu0 0.0
  %230 = vmatpush2.msra.mxu0 0.0
  %231 = vmatprep.subr.mxu0 0.0
  %232 = vmatpush2.msra.mxu0 0.0
  %233 = vmatprep.subr.mxu0 0.0
  %234 = vmatpush2.msra.mxu0 0.0
  %235 = vmatprep.subr.mxu0 0.0
  %236 = vmatpush2.msra.mxu0 0.0
  %237 = vmatprep.mubr.f32.mxu0 0.0
  %238 = vmatmul.mubr.f32.gmra.mxu0 %v169
  %v239 = vpop.f32.mrf.mxu0
  %v240 = vadd.f32 %v161, %v239
  %v241 = vpop.f32.mrf.mxu0
  %v242 = vadd.f32 %v161, %v241
  %243 = vmatprep.mubr.f32.mxu0 0.0
  %244 = vmatmul.mubr.f32.gmra.mxu0 %v171
  %v245 = vpop.f32.mrf.mxu0
  %v246 = vadd.f32 %v166, %v245
  %v247 = vpop.f32.mrf.mxu0
  %v248 = vadd.f32 %v166, %v247
  %249 = vdwg.mxu0
  %v250 = vmax.f32 %v240, 0.0
  %v251 = vmax.f32 %v242, 0.0
  %v252 = vmax.f32 %v246, 0.0
  %v253 = vmax.f32 %v248, 0.0
  %254 = vst [vmem:[%s2] sm:$0xff] %v250
  %255 = vst [vmem:[%s2 + $0x8] sm:$0xff] %v251
  %256 = vst [vmem:[%s2 + $0x10] sm:$0xff] %v252
  %257 = vst [vmem:[%s2 + $0x18] sm:$0xff] %v253
  // Predicated region
  $region10: #{depthwise_separable_conv_forward.1} parent=0 // pred_check
    _
  $region11: #{depthwise_separable_conv_forward.1} parent=0 // pred_check_branch
    %259 = sbr.rel (0) target = $region13
  $region12: #{depthwise_separable_conv_forward.1} parent=0 // pred_region
    _
  $region13: #{depthwise_separable_conv_forward.1} parent=0 // pred_fallthru
    _
  // Predicated region
  $region14: #{depthwise_separable_conv_forward.1} parent=0 // pred_check
    _
  $region15: #{depthwise_separable_conv_forward.1} parent=0 // pred_check_branch
    %261 = sbr.rel (0) target = $region17
  $region16: #{depthwise_separable_conv_forward.1} parent=0 // pred_region
    _
  $region17: #{depthwise_separable_conv_forward.1} parent=0 // pred_fallthru
    _

</llo_original>
